<compile_context>
chip_gen: v5e
topology: v5e:2x2
jax: 0.10.0
libtpu: 0.0.40
codegen_flags: <defaults>
</compile_context>

<pallas_src>
import jax
import jax.numpy as jnp
from jax.experimental import pallas as pl
from jax.experimental.pallas import tpu as pltpu

LN_EPS = 1e-5


def _round_up(x, m):
    return ((x + m - 1) // m) * m


def _vmem_capacity_bytes():
    try:
        return int(pltpu.get_tpu_info().vmem_capacity_bytes)
    except Exception:
        return 64 * 1024 * 1024  # conservative default (v7x per-TensorCore)


def _layernorm_epilogue(r, g, beta, d_in, out_dtype):
    # Padded feature lanes of r are exactly zero (zero-padded x, W2 columns, b2),
    # so the sums over the padded width equal the true-width sums and no lane
    # mask is needed (E[r^2] - mean^2 formulation).
    inv_d = 1.0 / float(d_in)
    mean = jnp.sum(r, axis=-1, keepdims=True) * inv_d
    var = jnp.sum(r * r, axis=-1, keepdims=True) * inv_d - mean * mean
    var = jnp.maximum(var, 0.0)
    normed = (r - mean) * jax.lax.rsqrt(var + LN_EPS)
    return (normed * g + beta).astype(out_dtype)


def _make_fused_kernel(d_in):
    """Single-pass kernel: weights fully resident, no reduction axis, no scratch."""

    def kernel(x_ref, w1_ref, b1_ref, w2_ref, b2_ref, g_ref, beta_ref, o_ref):
        x = x_ref[...]                                           # (rt, d_pad), MXU dtype
        h = jnp.dot(x, w1_ref[...], preferred_element_type=jnp.float32)
        h = jnp.maximum(h + b1_ref[...], 0.0)                    # bias + ReLU in f32 (VPU)
        y = jnp.dot(h.astype(x.dtype), w2_ref[...],
                    preferred_element_type=jnp.float32)
        r = y + b2_ref[...] + x.astype(jnp.float32)              # residual in f32
        o_ref[...] = _layernorm_epilogue(r, g_ref[...], beta_ref[...], d_in,
                                         o_ref.dtype)

    return kernel


def _make_ktiled_kernel(d_in):
    """d_hid-sliced kernel with an f32 VMEM accumulator (very large d_hid)."""

    def kernel(x_ref, w1_ref, b1_ref, w2_ref, b2_ref, g_ref, beta_ref,
               o_ref, acc_ref):
        k = pl.program_id(1)

        @pl.when(k == 0)
        def _():
            acc_ref[...] = jnp.zeros_like(acc_ref)

        x = x_ref[...]
        h = jnp.dot(x, w1_ref[...], preferred_element_type=jnp.float32)
        h = jnp.maximum(h + b1_ref[...], 0.0)
        acc_ref[...] += jnp.dot(h.astype(x.dtype), w2_ref[...],
                                preferred_element_type=jnp.float32)

        @pl.when(k == pl.num_programs(1) - 1)
        def _():
            r = acc_ref[...] + b2_ref[...] + x.astype(jnp.float32)
            o_ref[...] = _layernorm_epilogue(r, g_ref[...], beta_ref[...],
                                             d_in, o_ref.dtype)

    return kernel


def positionwise_ffn_conv(x, w1, b1, w2, b2, gamma, beta, *,
                          row_tile=None, k_tile=None, mxu_dtype=None):
    """Fused forward of PositionwiseFeedForwardUseConv (eval mode).

    x: (B, T, d_in); w1: (d_hid, d_in); b1: (d_hid,); w2: (d_in, d_hid);
    b2, gamma, beta: (d_in,).  Returns (B, T, d_in).

    row_tile:  tokens per grid step (None = auto).
    k_tile:    optional d_hid slice size (multiple of 128 dividing d_hid); None = auto.
    mxu_dtype: optional dtype for MXU operands (e.g. jnp.bfloat16) -- opt-in,
               changes matmul numerics; accumulation and epilogue stay f32.
    """
    B, T, d_in = x.shape
    d_hid = w1.shape[0]
    N = B * T

    cdt = jnp.dtype(mxu_dtype) if mxu_dtype is not None else x.dtype
    itemsize = jnp.dtype(cdt).itemsize
    out_itemsize = jnp.dtype(x.dtype).itemsize

    d_pad = _round_up(d_in, 128)
    min_sub = max(8, 32 // itemsize)            # 8 rows for f32, 16 for bf16

    # ---- per-generation VMEM budget ----------------------------------------
    vmem_cap = _vmem_capacity_bytes()           # 128 MiB v5e/v6e, 64 MiB v7x
    vmem_limit = min(128 << 20, max(32 << 20, (vmem_cap * 7) // 8))
    budget = (vmem_limit * 3) // 4              # headroom for Mosaic internal scratch

    def vmem_need(rt_, tk_, nk_):
        w_bufs = 1 if nk_ == 1 else 2                               # resident vs streamed
        w = 2 * d_pad * tk_ * itemsize * w_bufs                     # W1 + W2 (slices)
        tiles = 2 * rt_ * d_pad * (itemsize + out_itemsize)         # x + out, double-buffered
        hbuf = rt_ * tk_ * (4 + itemsize)                           # relu acts + cast copy
        acc = rt_ * d_pad * 4 if nk_ > 1 else 0
        consts = 4 * (tk_ + 3 * d_pad) * 4
        return w + tiles + hbuf + acc + consts

    # ---- row tile -----------------------------------------------------------
    row_auto = row_tile is None
    if row_auto:
        row_tile = 256
    rt = _round_up(min(row_tile, _round_up(N, min_sub)), min_sub)

    # ---- d_hid tiling: prefer full weight residency, stream slices only if needed
    if k_tile is not None:
        assert k_tile % 128 == 0 and d_hid % k_tile == 0
        tk, n_k = k_tile, d_hid // k_tile
    elif vmem_need(rt, d_hid, 1) <= budget:
        tk, n_k = d_hid, 1                                          # weights resident
    else:
        if row_auto:
            # streamed weights: raise row tile so arithmetic intensity clears HBM ridge
            rt = _round_up(min(max(rt, 512), _round_up(N, min_sub)), min_sub)
        granule = next((g for g in (512, 256, 128) if d_hid % g == 0), None)
        if granule is None:
            tk, n_k = d_hid, 1
        else:
            cands = [t for t in range(d_hid, granule - 1, -granule)
                     if d_hid % t == 0]
            tk = next((t for t in cands
                       if vmem_need(rt, t, d_hid // t) <= budget), granule)
            n_k = d_hid // tk

    # ---- v7x (2 TensorCores, small VMEM): keep >=2 row tiles on the parallel axis
    if vmem_cap <= 96 * 1024 * 1024 and _round_up(N, rt) // rt < 2 and N >= 2 * min_sub:
        rt = _round_up(-(-N // 2), min_sub)

    n_pad = _round_up(N, rt)
    n_row_tiles = n_pad // rt

    # ---- host-side layout (lane-dense padded features; k=1 convs as matmuls).
    # NOTE: in production the transposed/padded weights should be cached with
    # the parameters rather than recomputed per call.
    x2 = x.reshape(N, d_in).astype(cdt)
    if n_pad != N or d_pad != d_in:
        x2 = jnp.pad(x2, ((0, n_pad - N), (0, d_pad - d_in)))

    w1_t = jnp.transpose(w1).astype(cdt)                            # (d_in, d_hid)
    w2_t = jnp.transpose(w2).astype(cdt)                            # (d_hid, d_in)
    if d_pad != d_in:
        w1_t = jnp.pad(w1_t, ((0, d_pad - d_in), (0, 0)))
        w2_t = jnp.pad(w2_t, ((0, 0), (0, d_pad - d_in)))

    b1_r = b1.reshape(1, d_hid).astype(jnp.float32)

    def _pad_feat(v):
        v = v.reshape(1, d_in).astype(jnp.float32)
        if d_pad != d_in:
            v = jnp.pad(v, ((0, 0), (0, d_pad - d_in)))
        return v

    b2_r, g_r, beta_r = _pad_feat(b2), _pad_feat(gamma), _pad_feat(beta)

    w_passes = 1 if n_k == 1 else n_row_tiles       # streamed weights re-fetched per row tile
    cost = pl.CostEstimate(
        flops=4 * N * d_in * d_hid,                 # two matmuls
        transcendentals=N,                          # one rsqrt per token
        bytes_accessed=(x2.size * itemsize
                        + (w1_t.size + w2_t.size) * itemsize * w_passes
                        + n_pad * d_pad * out_itemsize),
    )

    def _run(buffer_constants):
        # Single-buffer grid-invariant inputs (constant index_map) so no VMEM is
        # wasted on a dead second copy of the weights / bias vectors.
        cmode = {"pipeline_mode": pl.Buffered(1)} if buffer_constants else {}

        if n_k == 1:
            kern = _make_fused_kernel(d_in)
            grid = (n_row_tiles,)
            in_specs = [
                pl.BlockSpec((rt, d_pad), lambda i: (i, 0)),               # x tile
                pl.BlockSpec((d_pad, d_hid), lambda i: (0, 0), **cmode),   # W1^T (resident)
                pl.BlockSpec((1, d_hid), lambda i: (0, 0), **cmode),       # b1
                pl.BlockSpec((d_hid, d_pad), lambda i: (0, 0), **cmode),   # W2^T (resident)
                pl.BlockSpec((1, d_pad), lambda i: (0, 0), **cmode),       # b2
                pl.BlockSpec((1, d_pad), lambda i: (0, 0), **cmode),       # gamma
                pl.BlockSpec((1, d_pad), lambda i: (0, 0), **cmode),       # beta
            ]
            out_spec = pl.BlockSpec((rt, d_pad), lambda i: (i, 0))
            scratch = []
            dims = ("parallel",)
        else:
            kern = _make_ktiled_kernel(d_in)
            grid = (n_row_tiles, n_k)
            in_specs = [
                pl.BlockSpec((rt, d_pad), lambda i, k: (i, 0)),            # x tile (resident over k)
                pl.BlockSpec((d_pad, tk), lambda i, k: (0, k)),            # W1^T slice
                pl.BlockSpec((1, tk), lambda i, k: (0, k)),                # b1 slice
                pl.BlockSpec((tk, d_pad), lambda i, k: (k, 0)),            # W2^T slice
                pl.BlockSpec((1, d_pad), lambda i, k: (0, 0), **cmode),    # b2
                pl.BlockSpec((1, d_pad), lambda i, k: (0, 0), **cmode),    # gamma
                pl.BlockSpec((1, d_pad), lambda i, k: (0, 0), **cmode),    # beta
            ]
            out_spec = pl.BlockSpec((rt, d_pad), lambda i, k: (i, 0))
            scratch = [pltpu.VMEM((rt, d_pad), jnp.float32)]
            dims = ("parallel", "arbitrary")

        return pl.pallas_call(
            kern,
            out_shape=jax.ShapeDtypeStruct((n_pad, d_pad), x.dtype),
            grid_spec=pltpu.PrefetchScalarGridSpec(
                num_scalar_prefetch=0,
                grid=grid,
                in_specs=in_specs,
                out_specs=out_spec,
                scratch_shapes=scratch,
            ),
            compiler_params=pltpu.CompilerParams(
                dimension_semantics=dims,
                vmem_limit_bytes=int(vmem_limit),
            ),
            cost_estimate=cost,
        )(x2, w1_t, b1_r, w2_t, b2_r, g_r, beta_r)

    try:
        out = _run(True)
    except Exception:
        # pl.Buffered / pipeline_mode unsupported in this JAX build -> default buffering
        out = _run(False)

    return out[:N, :d_in].reshape(B, T, d_in)


def _reference(x, w1, b1, w2, b2, gamma, beta):
    # pure-JAX reference mirroring the PyTorch forward (eval mode)
    h = jnp.maximum(jnp.einsum("btc,hc->bth", x, w1) + b1, 0.0)
    y = jnp.einsum("bth,ch->btc", h, w2) + b2
    r = y + x
    mean = jnp.mean(r, axis=-1, keepdims=True)
    var = jnp.mean((r - mean) ** 2, axis=-1, keepdims=True)
    return (r - mean) / jnp.sqrt(var + LN_EPS) * gamma + beta


def _make_params(key, d_in, d_hid):
    k1, kb1, k2, kb2 = jax.random.split(key, 4)
    bound1 = 1.0 / (d_in ** 0.5)
    bound2 = 1.0 / (d_hid ** 0.5)
    w1 = jax.random.uniform(k1, (d_hid, d_in), minval=-bound1, maxval=bound1)
    b1 = jax.random.uniform(kb1, (d_hid,), minval=-bound1, maxval=bound1)
    w2 = jax.random.uniform(k2, (d_in, d_hid), minval=-bound2, maxval=bound2)
    b2 = jax.random.uniform(kb2, (d_in,), minval=-bound2, maxval=bound2)
    gamma = jnp.ones((d_in,), dtype=jnp.float32)   # LayerNorm default init
    beta = jnp.zeros((d_in,), dtype=jnp.float32)
    return w1, b1, w2, b2, gamma, beta


if __name__ == "__main__":
    key = jax.random.PRNGKey(0)
    kx1, kp1, kx2, kp2 = jax.random.split(key, 4)

    # 1) common path: weights fully resident (n_k == 1), fused kernel, no scratch
    B, T, d_in, d_hid = 2, 8, 32, 64
    x = jax.random.normal(kx1, (B, T, d_in), dtype=jnp.float32)
    params = _make_params(kp1, d_in, d_hid)
    out = jax.block_until_ready(positionwise_ffn_conv(x, *params))
    ref = _reference(x, *params)
    assert out.shape == (B, T, d_in)
    assert jnp.allclose(out, ref, atol=1e-4, rtol=1e-4), "fused path mismatch"

    # 2) d_hid-sliced accumulator path (forced k_tile) to exercise the reduction grid
    d_hid2 = 256
    x2 = jax.random.normal(kx2, (B, T, d_in), dtype=jnp.float32)
    params2 = _make_params(kp2, d_in, d_hid2)
    out2 = jax.block_until_ready(positionwise_ffn_conv(x2, *params2, k_tile=128))
    ref2 = _reference(x2, *params2)
    assert out2.shape == (B, T, d_in)
    assert jnp.allclose(out2, ref2, atol=1e-4, rtol=1e-4), "k-tiled path mismatch"

    print("KERNEL_OK")
</pallas_src>

<mosaic_0001>
module attributes {stable_mosaic.version = 11 : i64} {
  func.func @kernel(%arg0: i32, %arg1: memref<8x128xf32, #tpu.memory_space<vmem>>, %arg2: memref<128x64xf32, #tpu.memory_space<vmem>>, %arg3: memref<1x64xf32, #tpu.memory_space<vmem>>, %arg4: memref<64x128xf32, #tpu.memory_space<vmem>>, %arg5: memref<1x128xf32, #tpu.memory_space<vmem>>, %arg6: memref<1x128xf32, #tpu.memory_space<vmem>>, %arg7: memref<1x128xf32, #tpu.memory_space<vmem>>, %arg8: memref<8x128xf32, #tpu.memory_space<vmem>>) attributes {dimension_semantics = [#tpu.dimension_semantics<parallel>], iteration_bounds = array<i64: 2>, scalar_prefetch = 0 : i64, scratch_operands = 0 : i64, tpu.core_type = #tpu.core_type<tc>, window_params = [{transform_indices = @transform_0, window_bounds = array<i64: 8, 128>}, {pipeline_mode = #tpu.pipeline_mode<synchronous>, transform_indices = @transform_1, window_bounds = array<i64: 128, 64>}, {pipeline_mode = #tpu.pipeline_mode<synchronous>, transform_indices = @transform_2, window_bounds = array<i64: 1, 64>}, {pipeline_mode = #tpu.pipeline_mode<synchronous>, transform_indices = @transform_3, window_bounds = array<i64: 64, 128>}, {pipeline_mode = #tpu.pipeline_mode<synchronous>, transform_indices = @transform_4, window_bounds = array<i64: 1, 128>}, {pipeline_mode = #tpu.pipeline_mode<synchronous>, transform_indices = @transform_5, window_bounds = array<i64: 1, 128>}, {pipeline_mode = #tpu.pipeline_mode<synchronous>, transform_indices = @transform_6, window_bounds = array<i64: 1, 128>}, {transform_indices = @transform_7, window_bounds = array<i64: 8, 128>}]} {
    %c0 = arith.constant 0 : index
    %c0_0 = arith.constant 0 : index
    %0 = vector.load %arg1[%c0, %c0_0] : memref<8x128xf32, #tpu.memory_space<vmem>>, vector<8x128xf32>
    %c0_1 = arith.constant 0 : index
    %c0_2 = arith.constant 0 : index
    %1 = vector.load %arg2[%c0_1, %c0_2] : memref<128x64xf32, #tpu.memory_space<vmem>>, vector<128x64xf32>
    %cst = arith.constant dense<0.000000e+00> : vector<8x64xf32>
    %2 = tpu.matmul %0, %1, %cst {dimension_numbers = #tpu.dot_dimension_numbers<[1], [0], [0], [1], [0, 0, 1, 1], [], []>} : vector<8x128xf32>, vector<128x64xf32>, vector<8x64xf32> -> vector<8x64xf32>
    %c0_3 = arith.constant 0 : index
    %c0_4 = arith.constant 0 : index
    %3 = vector.load %arg3[%c0_3, %c0_4] : memref<1x64xf32, #tpu.memory_space<vmem>>, vector<1x64xf32>
    %4 = vector.broadcast %3 : vector<1x64xf32> to vector<8x64xf32>
    %5 = arith.addf %2, %4 : vector<8x64xf32>
    %cst_5 = arith.constant 0.000000e+00 : f32
    %6 = vector.broadcast %cst_5 : f32 to vector<8x64xf32>
    %7 = arith.maximumf %5, %6 : vector<8x64xf32>
    %c0_6 = arith.constant 0 : index
    %c0_7 = arith.constant 0 : index
    %8 = vector.load %arg4[%c0_6, %c0_7] : memref<64x128xf32, #tpu.memory_space<vmem>>, vector<64x128xf32>
    %cst_8 = arith.constant dense<0.000000e+00> : vector<8x128xf32>
    %9 = tpu.matmul %7, %8, %cst_8 {dimension_numbers = #tpu.dot_dimension_numbers<[1], [0], [0], [1], [0, 0, 1, 1], [], []>} : vector<8x64xf32>, vector<64x128xf32>, vector<8x128xf32> -> vector<8x128xf32>
    %c0_9 = arith.constant 0 : index
    %c0_10 = arith.constant 0 : index
    %10 = vector.load %arg5[%c0_9, %c0_10] : memref<1x128xf32, #tpu.memory_space<vmem>>, vector<1x128xf32>
    %11 = vector.broadcast %10 : vector<1x128xf32> to vector<8x128xf32>
    %12 = arith.addf %9, %11 : vector<8x128xf32>
    %13 = arith.addf %12, %0 : vector<8x128xf32>
    %c0_11 = arith.constant 0 : index
    %c0_12 = arith.constant 0 : index
    %14 = vector.load %arg6[%c0_11, %c0_12] : memref<1x128xf32, #tpu.memory_space<vmem>>, vector<1x128xf32>
    %c0_13 = arith.constant 0 : index
    %c0_14 = arith.constant 0 : index
    %15 = vector.load %arg7[%c0_13, %c0_14] : memref<1x128xf32, #tpu.memory_space<vmem>>, vector<1x128xf32>
    %cst_15 = arith.constant dense<0.000000e+00> : vector<8xf32>
    %16 = vector.multi_reduction <add>, %13, %cst_15 [1] : vector<8x128xf32> to vector<8xf32>
    %17 = vector.shape_cast %16 : vector<8xf32> to vector<8x1xf32>
    %cst_16 = arith.constant 3.125000e-02 : f32
    %18 = vector.broadcast %cst_16 : f32 to vector<8x1xf32>
    %19 = arith.mulf %17, %18 : vector<8x1xf32>
    %20 = arith.mulf %13, %13 : vector<8x128xf32>
    %cst_17 = arith.constant dense<0.000000e+00> : vector<8xf32>
    %21 = vector.multi_reduction <add>, %20, %cst_17 [1] : vector<8x128xf32> to vector<8xf32>
    %22 = vector.shape_cast %21 : vector<8xf32> to vector<8x1xf32>
    %cst_18 = arith.constant 3.125000e-02 : f32
    %23 = vector.broadcast %cst_18 : f32 to vector<8x1xf32>
    %24 = arith.mulf %22, %23 : vector<8x1xf32>
    %25 = arith.mulf %19, %19 : vector<8x1xf32>
    %26 = arith.subf %24, %25 : vector<8x1xf32>
    %cst_19 = arith.constant 0.000000e+00 : f32
    %27 = vector.broadcast %cst_19 : f32 to vector<8x1xf32>
    %28 = arith.maximumf %26, %27 : vector<8x1xf32>
    %29 = vector.broadcast %19 : vector<8x1xf32> to vector<8x128xf32>
    %30 = arith.subf %13, %29 : vector<8x128xf32>
    %cst_20 = arith.constant 9.99999974E-6 : f32
    %31 = vector.broadcast %cst_20 : f32 to vector<8x1xf32>
    %32 = arith.addf %28, %31 : vector<8x1xf32>
    %33 = math.rsqrt %32 : vector<8x1xf32>
    %34 = vector.broadcast %33 : vector<8x1xf32> to vector<8x128xf32>
    %35 = arith.mulf %30, %34 : vector<8x128xf32>
    %36 = vector.broadcast %14 : vector<1x128xf32> to vector<8x128xf32>
    %37 = arith.mulf %35, %36 : vector<8x128xf32>
    %38 = vector.broadcast %15 : vector<1x128xf32> to vector<8x128xf32>
    %39 = arith.addf %37, %38 : vector<8x128xf32>
    %c0_21 = arith.constant 0 : index
    %c0_22 = arith.constant 0 : index
    %40 = vector.load %arg8[%c0_21, %c0_22] : memref<8x128xf32, #tpu.memory_space<vmem>>, vector<8x128xf32>
    tpu.vector_store %arg8[%c0_21, %c0_22], %39 {strides = array<i32>} : memref<8x128xf32, #tpu.memory_space<vmem>>, vector<8x128xf32>,
    return
  }
  func.func @transform_0(%arg0: i32) -> (i32, i32) {
    %c0_i32 = arith.constant 0 : i32
    %c0_i32_0 = arith.constant 0 : i32
    return %arg0, %c0_i32 : i32, i32
  }
  func.func @transform_1(%arg0: i32) -> (i32, i32) {
    %c0_i32 = arith.constant 0 : i32
    %c0_i32_0 = arith.constant 0 : i32
    %c0_i32_1 = arith.constant 0 : i32
    return %c0_i32, %c0_i32_0 : i32, i32
  }
  func.func @transform_2(%arg0: i32) -> (i32, i32) {
    %c0_i32 = arith.constant 0 : i32
    %c0_i32_0 = arith.constant 0 : i32
    %c0_i32_1 = arith.constant 0 : i32
    return %c0_i32, %c0_i32_0 : i32, i32
  }
  func.func @transform_3(%arg0: i32) -> (i32, i32) {
    %c0_i32 = arith.constant 0 : i32
    %c0_i32_0 = arith.constant 0 : i32
    %c0_i32_1 = arith.constant 0 : i32
    return %c0_i32, %c0_i32_0 : i32, i32
  }
  func.func @transform_4(%arg0: i32) -> (i32, i32) {
    %c0_i32 = arith.constant 0 : i32
    %c0_i32_0 = arith.constant 0 : i32
    %c0_i32_1 = arith.constant 0 : i32
    return %c0_i32, %c0_i32_0 : i32, i32
  }
  func.func @transform_5(%arg0: i32) -> (i32, i32) {
    %c0_i32 = arith.constant 0 : i32
    %c0_i32_0 = arith.constant 0 : i32
    %c0_i32_1 = arith.constant 0 : i32
    return %c0_i32, %c0_i32_0 : i32, i32
  }
  func.func @transform_6(%arg0: i32) -> (i32, i32) {
    %c0_i32 = arith.constant 0 : i32
    %c0_i32_0 = arith.constant 0 : i32
    %c0_i32_1 = arith.constant 0 : i32
    return %c0_i32, %c0_i32_0 : i32, i32
  }
  func.func @transform_7(%arg0: i32) -> (i32, i32) {
    %c0_i32 = arith.constant 0 : i32
    %c0_i32_0 = arith.constant 0 : i32
    return %arg0, %c0_i32 : i32, i32
  }
}

module attributes {stable_mosaic.version = 11 : i64} {
  func.func @kernel(%arg0: i32, %arg1: memref<8x128xf32, #tpu.memory_space<vmem>>, %arg2: memref<128x64xf32, #tpu.memory_space<vmem>>, %arg3: memref<1x64xf32, #tpu.memory_space<vmem>>, %arg4: memref<64x128xf32, #tpu.memory_space<vmem>>, %arg5: memref<1x128xf32, #tpu.memory_space<vmem>>, %arg6: memref<1x128xf32, #tpu.memory_space<vmem>>, %arg7: memref<1x128xf32, #tpu.memory_space<vmem>>, %arg8: memref<8x128xf32, #tpu.memory_space<vmem>>) attributes {dimension_semantics = [#tpu.dimension_semantics<parallel>], iteration_bounds = array<i64: 2>, scalar_prefetch = 0 : i64, scratch_operands = 0 : i64, tpu.core_type = #tpu.core_type<tc>, window_params = [{transform_indices = @transform_0, window_bounds = array<i64: 8, 128>}, {pipeline_mode = #tpu.pipeline_mode<synchronous>, transform_indices = @transform_1, window_bounds = array<i64: 128, 64>}, {pipeline_mode = #tpu.pipeline_mode<synchronous>, transform_indices = @transform_2, window_bounds = array<i64: 1, 64>}, {pipeline_mode = #tpu.pipeline_mode<synchronous>, transform_indices = @transform_3, window_bounds = array<i64: 64, 128>}, {pipeline_mode = #tpu.pipeline_mode<synchronous>, transform_indices = @transform_4, window_bounds = array<i64: 1, 128>}, {pipeline_mode = #tpu.pipeline_mode<synchronous>, transform_indices = @transform_5, window_bounds = array<i64: 1, 128>}, {pipeline_mode = #tpu.pipeline_mode<synchronous>, transform_indices = @transform_6, window_bounds = array<i64: 1, 128>}, {transform_indices = @transform_7, window_bounds = array<i64: 8, 128>}]} {
    %c0 = arith.constant 0 : index
    %c0_0 = arith.constant 0 : index
    %0 = vector.load %arg1[%c0, %c0_0] : memref<8x128xf32, #tpu.memory_space<vmem>>, vector<8x128xf32>
    %c0_1 = arith.constant 0 : index
    %c0_2 = arith.constant 0 : index
    %1 = vector.load %arg2[%c0_1, %c0_2] : memref<128x64xf32, #tpu.memory_space<vmem>>, vector<128x64xf32>
    %cst = arith.constant dense<0.000000e+00> : vector<8x64xf32>
    %2 = tpu.matmul %0, %1, %cst {dimension_numbers = #tpu.dot_dimension_numbers<[1], [0], [0], [1], [0, 0, 1, 1], [], []>} : vector<8x128xf32>, vector<128x64xf32>, vector<8x64xf32> -> vector<8x64xf32>
    %c0_3 = arith.constant 0 : index
    %c0_4 = arith.constant 0 : index
    %3 = vector.load %arg3[%c0_3, %c0_4] : memref<1x64xf32, #tpu.memory_space<vmem>>, vector<1x64xf32>
    %4 = vector.broadcast %3 : vector<1x64xf32> to vector<8x64xf32>
    %5 = arith.addf %2, %4 : vector<8x64xf32>
    %cst_5 = arith.constant 0.000000e+00 : f32
    %6 = vector.broadcast %cst_5 : f32 to vector<8x64xf32>
    %7 = arith.maximumf %5, %6 : vector<8x64xf32>
    %c0_6 = arith.constant 0 : index
    %c0_7 = arith.constant 0 : index
    %8 = vector.load %arg4[%c0_6, %c0_7] : memref<64x128xf32, #tpu.memory_space<vmem>>, vector<64x128xf32>
    %cst_8 = arith.constant dense<0.000000e+00> : vector<8x128xf32>
    %9 = tpu.matmul %7, %8, %cst_8 {dimension_numbers = #tpu.dot_dimension_numbers<[1], [0], [0], [1], [0, 0, 1, 1], [], []>} : vector<8x64xf32>, vector<64x128xf32>, vector<8x128xf32> -> vector<8x128xf32>
    %c0_9 = arith.constant 0 : index
    %c0_10 = arith.constant 0 : index
    %10 = vector.load %arg5[%c0_9, %c0_10] : memref<1x128xf32, #tpu.memory_space<vmem>>, vector<1x128xf32>
    %11 = vector.broadcast %10 : vector<1x128xf32> to vector<8x128xf32>
    %12 = arith.addf %9, %11 : vector<8x128xf32>
    %13 = arith.addf %12, %0 : vector<8x128xf32>
    %c0_11 = arith.constant 0 : index
    %c0_12 = arith.constant 0 : index
    %14 = vector.load %arg6[%c0_11, %c0_12] : memref<1x128xf32, #tpu.memory_space<vmem>>, vector<1x128xf32>
    %c0_13 = arith.constant 0 : index
    %c0_14 = arith.constant 0 : index
    %15 = vector.load %arg7[%c0_13, %c0_14] : memref<1x128xf32, #tpu.memory_space<vmem>>, vector<1x128xf32>
    %cst_15 = arith.constant dense<0.000000e+00> : vector<8xf32>
    %16 = vector.multi_reduction <add>, %13, %cst_15 [1] : vector<8x128xf32> to vector<8xf32>
    %17 = vector.shape_cast %16 : vector<8xf32> to vector<8x1xf32>
    %cst_16 = arith.constant 3.125000e-02 : f32
    %18 = vector.broadcast %cst_16 : f32 to vector<8x1xf32>
    %19 = arith.mulf %17, %18 : vector<8x1xf32>
    %20 = arith.mulf %13, %13 : vector<8x128xf32>
    %cst_17 = arith.constant dense<0.000000e+00> : vector<8xf32>
    %21 = vector.multi_reduction <add>, %20, %cst_17 [1] : vector<8x128xf32> to vector<8xf32>
    %22 = vector.shape_cast %21 : vector<8xf32> to vector<8x1xf32>
    %cst_18 = arith.constant 3.125000e-02 : f32
    %23 = vector.broadcast %cst_18 : f32 to vector<8x1xf32>
    %24 = arith.mulf %22, %23 : vector<8x1xf32>
    %25 = arith.mulf %19, %19 : vector<8x1xf32>
    %26 = arith.subf %24, %25 : vector<8x1xf32>
    %cst_19 = arith.constant 0.000000e+00 : f32
    %27 = vector.broadcast %cst_19 : f32 to vector<8x1xf32>
    %28 = arith.maximumf %26, %27 : vector<8x1xf32>
    %29 = vector.broadcast %19 : vector<8x1xf32> to vector<8x128xf32>
    %30 = arith.subf %13, %29 : vector<8x128xf32>
    %cst_20 = arith.constant 9.99999974E-6 : f32
    %31 = vector.broadcast %cst_20 : f32 to vector<8x1xf32>
    %32 = arith.addf %28, %31 : vector<8x1xf32>
    %33 = math.rsqrt %32 : vector<8x1xf32>
    %34 = vector.broadcast %33 : vector<8x1xf32> to vector<8x128xf32>
    %35 = arith.mulf %30, %34 : vector<8x128xf32>
    %36 = vector.broadcast %14 : vector<1x128xf32> to vector<8x128xf32>
    %37 = arith.mulf %35, %36 : vector<8x128xf32>
    %38 = vector.broadcast %15 : vector<1x128xf32> to vector<8x128xf32>
    %39 = arith.addf %37, %38 : vector<8x128xf32>
    %c0_21 = arith.constant 0 : index
    %c0_22 = arith.constant 0 : index
    %40 = vector.load %arg8[%c0_21, %c0_22] : memref<8x128xf32, #tpu.memory_space<vmem>>, vector<8x128xf32>
    tpu.vector_store %arg8[%c0_21, %c0_22], %39 {strides = array<i32>} : memref<8x128xf32, #tpu.memory_space<vmem>>, vector<8x128xf32>,
    return
  }
  func.func @transform_0(%arg0: i32) -> (i32, i32) {
    %c0_i32 = arith.constant 0 : i32
    %c0_i32_0 = arith.constant 0 : i32
    return %arg0, %c0_i32 : i32, i32
  }
  func.func @transform_1(%arg0: i32) -> (i32, i32) {
    %c0_i32 = arith.constant 0 : i32
    %c0_i32_0 = arith.constant 0 : i32
    %c0_i32_1 = arith.constant 0 : i32
    return %c0_i32, %c0_i32_0 : i32, i32
  }
  func.func @transform_2(%arg0: i32) -> (i32, i32) {
    %c0_i32 = arith.constant 0 : i32
    %c0_i32_0 = arith.constant 0 : i32
    %c0_i32_1 = arith.constant 0 : i32
    return %c0_i32, %c0_i32_0 : i32, i32
  }
  func.func @transform_3(%arg0: i32) -> (i32, i32) {
    %c0_i32 = arith.constant 0 : i32
    %c0_i32_0 = arith.constant 0 : i32
    %c0_i32_1 = arith.constant 0 : i32
    return %c0_i32, %c0_i32_0 : i32, i32
  }
  func.func @transform_4(%arg0: i32) -> (i32, i32) {
    %c0_i32 = arith.constant 0 : i32
    %c0_i32_0 = arith.constant 0 : i32
    %c0_i32_1 = arith.constant 0 : i32
    return %c0_i32, %c0_i32_0 : i32, i32
  }
  func.func @transform_5(%arg0: i32) -> (i32, i32) {
    %c0_i32 = arith.constant 0 : i32
    %c0_i32_0 = arith.constant 0 : i32
    %c0_i32_1 = arith.constant 0 : i32
    return %c0_i32, %c0_i32_0 : i32, i32
  }
  func.func @transform_6(%arg0: i32) -> (i32, i32) {
    %c0_i32 = arith.constant 0 : i32
    %c0_i32_0 = arith.constant 0 : i32
    %c0_i32_1 = arith.constant 0 : i32
    return %c0_i32, %c0_i32_0 : i32, i32
  }
  func.func @transform_7(%arg0: i32) -> (i32, i32) {
    %c0_i32 = arith.constant 0 : i32
    %c0_i32_0 = arith.constant 0 : i32
    return %arg0, %c0_i32 : i32, i32
  }
}

</mosaic_0001>

<llo_original>
// kernel: tpu_custom_call.1
$region0: #{tpu_custom_call.1}
  #allocation0 [shape = 'u32[]', space=smem, size = 0x4, offset = 0x4, fixed_abs, tag = 'smem constant byte address 0x4 - core index']
  #allocation1 [shape = 'u32[72,128]{1,0:T(1,128)}', space=vmem, size = 0x9000, scoped, tag = 'internal scratch']
  %s0 = inlined_call_operand.vmem [shape: f32[16,128], index: 0, kind: input, shape index: {}]
  %s1 = inlined_call_operand.vmem [shape: f32[128,64], index: 1, kind: input, shape index: {}]
  %s2 = inlined_call_operand.vmem [shape: f32[1,64], index: 2, kind: input, shape index: {}]
  %s3 = inlined_call_operand.vmem [shape: f32[64,128], index: 3, kind: input, shape index: {}]
  %s4 = inlined_call_operand.vmem [shape: f32[1,128], index: 4, kind: input, shape index: {}]
  %s5 = inlined_call_operand.vmem [shape: f32[1,128], index: 5, kind: input, shape index: {}]
  %s6 = inlined_call_operand.vmem [shape: f32[1,128], index: 6, kind: input, shape index: {}]
  %s7 = inlined_call_operand.hbm [shape: f32[16,128], index: 7, kind: output, shape index: {}]
  %s8 = sld [smem:[#allocation0]]
  $region61: #{tpu_custom_call.1} parent=0
    _
  %s10 = ssub.s32 1, %s8
  %s11 = scalar_select 0, %s10, %s8
  $region1: #{tpu_custom_call.1} parent=0
    #allocation2 [shape = 'u8[8192]{0}', space=vmem, size = 0x2000, scoped, tag = 'output window, operand 0']
    #allocation3 [shape = 's32[2]{0}', space=sflag, size = 0x8, scoped, tag = 'scoped memory for tpu_custom_call.1']
    %12 = vsyncpa [#allocation3], 0
    %s13 = scalar_lea.sflag [#allocation3], 1
    %14 = vsyncpa %s13, 0
    loop: start=0, step=1, limit=4
    $region2: #{tpu_custom_call.1} parent=1 // loop_pre_header
      _
    $region3: #{tpu_custom_call.1} parent=1 // loop_header
      %s16 = sphi 0, %s20
      %p17 = scmp.ge.s32.totalorder %s16, 4
      %s26 = sphi 0, %s28
      %s29 = sphi 0, %s26
      %s30 = sphi 0, %s29
      %s46 = sphi 0, %s30
      %s50 = sphi 0, %s50
      %s52 = sphi 0, %s50
      %s53 = sphi 0, %s52
      %s67 = sphi 0, %s53
      %s71 = sphi 0, %s71
      %s73 = sphi 0, %s71
      %s74 = sphi 0, %s73
      %s88 = sphi 0, %s74
      %s92 = sphi 0, %s92
      %s94 = sphi 0, %s92
      %s95 = sphi 0, %s94
      %s109 = sphi 0, %s95
      %s113 = sphi 0, %s113
      %s115 = sphi 0, %s113
      %s116 = sphi 0, %s115
      %s130 = sphi 0, %s116
      %s134 = sphi 0, %s134
      %s136 = sphi 0, %s134
      %s137 = sphi 0, %s136
      %s151 = sphi 0, %s137
      %s155 = sphi 0, %s155
      %s157 = sphi 0, %s155
      %s158 = sphi 0, %s157
      %s172 = sphi 0, %s158
      %s178 = sphi 0, %s180
      %s181 = sphi 0, %s178
      %s182 = sphi 0, %s181
      %s198 = sphi 0, %s182
    $region4: #{tpu_custom_call.1} parent=1 // loop_header_branch
      %19 = sbr.rel (%p17) target = $region8
    $region5: #{tpu_custom_call.1} parent=1 // loop_body
      %s21 = ssub.s32 %s16, 1
      %s22 = ssub.s32 %s16, 2
      %s23 = sadd.s32 %s16, 1
      %s24 = ssub.s32 %s16, %s23
      %p25 = scmp.eq.s32.totalorder %s24, 0
      %s27 = sadd.s32 %s26, 1
      %s28 = scalar_select %p25, %s26, %s27
      %p31 = pneg %p25
      %p32 = scmp.eq.s32.totalorder %s16, 1
      %p33 = por %p31, %p32
      %p34 = scmp.ne.s32.totalorder %s26, %s29
      %p35 = scmp.eq.s32.totalorder %s16, 0
      %p36 = por %p34, %p35
      %p37 = scmp.ne.s32.totalorder %s26, %s29
      %p38 = scmp.eq.s32.totalorder %s21, 1
      %p39 = por %p37, %p38
      %p40 = scmp.ne.s32.totalorder %s29, %s30
      %p41 = scmp.eq.s32.totalorder %s21, 0
      %p42 = por %p40, %p41
      %p43 = scmp.ne.s32.totalorder %s29, %s30
      %p44 = scmp.eq.s32.totalorder %s22, 1
      %p45 = por %p43, %p44
      %p47 = scmp.ne.s32.totalorder %s30, %s46
      %p48 = scmp.eq.s32.totalorder %s22, 0
      %p49 = por %p47, %p48
      %s51 = sadd.s32 %s50, 1
      %p54 = scmp.eq.s32.totalorder %s16, 1
      %p55 = scmp.ne.s32.totalorder %s50, %s52
      %p56 = scmp.eq.s32.totalorder %s16, 0
      %p57 = por %p55, %p56
      %p58 = scmp.ne.s32.totalorder %s50, %s52
      %p59 = scmp.eq.s32.totalorder %s21, 1
      %p60 = por %p58, %p59
      %p61 = scmp.ne.s32.totalorder %s52, %s53
      %p62 = scmp.eq.s32.totalorder %s21, 0
      %p63 = por %p61, %p62
      %p64 = scmp.ne.s32.totalorder %s52, %s53
      %p65 = scmp.eq.s32.totalorder %s22, 1
      %p66 = por %p64, %p65
      %p68 = scmp.ne.s32.totalorder %s53, %s67
      %p69 = scmp.eq.s32.totalorder %s22, 0
      %p70 = por %p68, %p69
      %s72 = sadd.s32 %s71, 1
      %p75 = scmp.eq.s32.totalorder %s16, 1
      %p76 = scmp.ne.s32.totalorder %s71, %s73
      %p77 = scmp.eq.s32.totalorder %s16, 0
      %p78 = por %p76, %p77
      %p79 = scmp.ne.s32.totalorder %s71, %s73
      %p80 = scmp.eq.s32.totalorder %s21, 1
      %p81 = por %p79, %p80
      %p82 = scmp.ne.s32.totalorder %s73, %s74
      %p83 = scmp.eq.s32.totalorder %s21, 0
      %p84 = por %p82, %p83
      %p85 = scmp.ne.s32.totalorder %s73, %s74
      %p86 = scmp.eq.s32.totalorder %s22, 1
      %p87 = por %p85, %p86
      %p89 = scmp.ne.s32.totalorder %s74, %s88
      %p90 = scmp.eq.s32.totalorder %s22, 0
      %p91 = por %p89, %p90
      %s93 = sadd.s32 %s92, 1
      %p96 = scmp.eq.s32.totalorder %s16, 1
      %p97 = scmp.ne.s32.totalorder %s92, %s94
      %p98 = scmp.eq.s32.totalorder %s16, 0
      %p99 = por %p97, %p98
      %p100 = scmp.ne.s32.totalorder %s92, %s94
      %p101 = scmp.eq.s32.totalorder %s21, 1
      %p102 = por %p100, %p101
      %p103 = scmp.ne.s32.totalorder %s94, %s95
      %p104 = scmp.eq.s32.totalorder %s21, 0
      %p105 = por %p103, %p104
      %p106 = scmp.ne.s32.totalorder %s94, %s95
      %p107 = scmp.eq.s32.totalorder %s22, 1
      %p108 = por %p106, %p107
      %p110 = scmp.ne.s32.totalorder %s95, %s109
      %p111 = scmp.eq.s32.totalorder %s22, 0
      %p112 = por %p110, %p111
      %s114 = sadd.s32 %s113, 1
      %p117 = scmp.eq.s32.totalorder %s16, 1
      %p118 = scmp.ne.s32.totalorder %s113, %s115
      %p119 = scmp.eq.s32.totalorder %s16, 0
      %p120 = por %p118, %p119
      %p121 = scmp.ne.s32.totalorder %s113, %s115
      %p122 = scmp.eq.s32.totalorder %s21, 1
      %p123 = por %p121, %p122
      %p124 = scmp.ne.s32.totalorder %s115, %s116
      %p125 = scmp.eq.s32.totalorder %s21, 0
      %p126 = por %p124, %p125
      %p127 = scmp.ne.s32.totalorder %s115, %s116
      %p128 = scmp.eq.s32.totalorder %s22, 1
      %p129 = por %p127, %p128
      %p131 = scmp.ne.s32.totalorder %s116, %s130
      %p132 = scmp.eq.s32.totalorder %s22, 0
      %p133 = por %p131, %p132
      %s135 = sadd.s32 %s134, 1
      %p138 = scmp.eq.s32.totalorder %s16, 1
      %p139 = scmp.ne.s32.totalorder %s134, %s136
      %p140 = scmp.eq.s32.totalorder %s16, 0
      %p141 = por %p139, %p140
      %p142 = scmp.ne.s32.totalorder %s134, %s136
      %p143 = scmp.eq.s32.totalorder %s21, 1
      %p144 = por %p142, %p143
      %p145 = scmp.ne.s32.totalorder %s136, %s137
      %p146 = scmp.eq.s32.totalorder %s21, 0
      %p147 = por %p145, %p146
      %p148 = scmp.ne.s32.totalorder %s136, %s137
      %p149 = scmp.eq.s32.totalorder %s22, 1
      %p150 = por %p148, %p149
      %p152 = scmp.ne.s32.totalorder %s137, %s151
      %p153 = scmp.eq.s32.totalorder %s22, 0
      %p154 = por %p152, %p153
      %s156 = sadd.s32 %s155, 1
      %p159 = scmp.eq.s32.totalorder %s16, 1
      %p160 = scmp.ne.s32.totalorder %s155, %s157
      %p161 = scmp.eq.s32.totalorder %s16, 0
      %p162 = por %p160, %p161
      %p163 = scmp.ne.s32.totalorder %s155, %s157
      %p164 = scmp.eq.s32.totalorder %s21, 1
      %p165 = por %p163, %p164
      %p166 = scmp.ne.s32.totalorder %s157, %s158
      %p167 = scmp.eq.s32.totalorder %s21, 0
      %p168 = por %p166, %p167
      %p169 = scmp.ne.s32.totalorder %s157, %s158
      %p170 = scmp.eq.s32.totalorder %s22, 1
      %p171 = por %p169, %p170
      %p173 = scmp.ne.s32.totalorder %s158, %s172
      %p174 = scmp.eq.s32.totalorder %s22, 0
      %p175 = por %p173, %p174
      %s176 = ssub.s32 %s16, %s23
      %p177 = scmp.eq.s32.totalorder %s176, 0
      %s179 = sadd.s32 %s178, 1
      %s180 = scalar_select %p177, %s178, %s179
      %p183 = pneg %p177
      %p184 = scmp.eq.s32.totalorder %s16, 1
      %p185 = por %p183, %p184
      %p186 = scmp.ne.s32.totalorder %s178, %s181
      %p187 = scmp.eq.s32.totalorder %s16, 0
      %p188 = por %p186, %p187
      %p189 = scmp.ne.s32.totalorder %s178, %s181
      %p190 = scmp.eq.s32.totalorder %s21, 1
      %p191 = por %p189, %p190
      %p192 = scmp.ne.s32.totalorder %s181, %s182
      %p193 = scmp.eq.s32.totalorder %s21, 0
      %p194 = por %p192, %p193
      %p195 = scmp.ne.s32.totalorder %s181, %s182
      %p196 = scmp.eq.s32.totalorder %s22, 1
      %p197 = por %p195, %p196
      %p199 = scmp.ne.s32.totalorder %s182, %s198
      %p200 = scmp.eq.s32.totalorder %s22, 0
      %p201 = por %p199, %p200
      %p202 = scmp.le.s32.totalorder 1, %s16
      %p203 = scmp.lt.s32.totalorder %s16, 3
      %p204 = pnand %p202, %p203
      %p205 = pneg %p204
      // Predicated region
      $region9: #{tpu_custom_call.1} parent=5 // pred_check
        _
      $region10: #{tpu_custom_call.1} parent=5 // pred_check_branch
        %207 = sbr.rel (%p204) target = $region12
      $region11: #{tpu_custom_call.1} parent=5 // pred_region
        %s208 = ssub.s32 %s16, 1
        // Predicated region
        $region13: #{tpu_custom_call.1} parent=11 // pred_check
          %p209 = pneg %p63
        $region14: #{tpu_custom_call.1} parent=11 // pred_check_branch
          %211 = sbr.rel (%p209) target = $region16
        $region15: #{tpu_custom_call.1} parent=11 // pred_region
          _
        $region16: #{tpu_custom_call.1} parent=11 // pred_fallthru
          _
        // Predicated region
        $region17: #{tpu_custom_call.1} parent=11 // pred_check
          %p212 = pneg %p84
        $region18: #{tpu_custom_call.1} parent=11 // pred_check_branch
          %214 = sbr.rel (%p212) target = $region20
        $region19: #{tpu_custom_call.1} parent=11 // pred_region
          _
        $region20: #{tpu_custom_call.1} parent=11 // pred_fallthru
          _
        // Predicated region
        $region21: #{tpu_custom_call.1} parent=11 // pred_check
          %p215 = pneg %p105
        $region22: #{tpu_custom_call.1} parent=11 // pred_check_branch
          %217 = sbr.rel (%p215) target = $region24
        $region23: #{tpu_custom_call.1} parent=11 // pred_region
          _
        $region24: #{tpu_custom_call.1} parent=11 // pred_fallthru
          _
        // Predicated region
        $region25: #{tpu_custom_call.1} parent=11 // pred_check
          %p218 = pneg %p126
        $region26: #{tpu_custom_call.1} parent=11 // pred_check_branch
          %220 = sbr.rel (%p218) target = $region28
        $region27: #{tpu_custom_call.1} parent=11 // pred_region
          _
        $region28: #{tpu_custom_call.1} parent=11 // pred_fallthru
          _
        // Predicated region
        $region29: #{tpu_custom_call.1} parent=11 // pred_check
          %p221 = pneg %p147
        $region30: #{tpu_custom_call.1} parent=11 // pred_check_branch
          %223 = sbr.rel (%p221) target = $region32
        $region31: #{tpu_custom_call.1} parent=11 // pred_region
          _
        $region32: #{tpu_custom_call.1} parent=11 // pred_fallthru
          _
        // Predicated region
        $region33: #{tpu_custom_call.1} parent=11 // pred_check
          %p224 = pneg %p168
        $region34: #{tpu_custom_call.1} parent=11 // pred_check_branch
          %226 = sbr.rel (%p224) target = $region36
        $region35: #{tpu_custom_call.1} parent=11 // pred_region
          _
        $region36: #{tpu_custom_call.1} parent=11 // pred_fallthru
          _
      $region12: #{tpu_custom_call.1} parent=5 // pred_fallthru
        _
      %p227 = scmp.lt.s32.totalorder %s16, 2
      // Predicated region
      $region37: #{tpu_custom_call.1} parent=5 // pred_check
        %p228 = pneg %p227
      $region38: #{tpu_custom_call.1} parent=5 // pred_check_branch
        %230 = sbr.rel (%p228) target = $region40
      $region39: #{tpu_custom_call.1} parent=5 // pred_region
        // Predicated region
        $region41: #{tpu_custom_call.1} parent=39 // pred_check
          %p231 = pneg %p36
        $region42: #{tpu_custom_call.1} parent=39 // pred_check_branch
          %233 = sbr.rel (%p231) target = $region44
        $region43: #{tpu_custom_call.1} parent=39 // pred_region
          %p234 = scmp.lt.s32.totalorder %s16, 1
          %s235 = scalar_select %p234, %s16, 1
          %s236 = smul.addr %s235, 8
          %s237 = scalar_lea.vmem %s0, %s236
        $region44: #{tpu_custom_call.1} parent=39 // pred_fallthru
          _
      $region40: #{tpu_custom_call.1} parent=5 // pred_fallthru
        _
      %p238 = scmp.le.s32.totalorder 1, %s16
      %p239 = scmp.lt.s32.totalorder %s16, 3
      %p240 = pnand %p238, %p239
      %p241 = pneg %p240
      // Predicated region
      $region45: #{tpu_custom_call.1} parent=5 // pred_check
        _
      $region46: #{tpu_custom_call.1} parent=5 // pred_check_branch
        %243 = sbr.rel (%p240) target = $region48
      $region47: #{tpu_custom_call.1} parent=5 // pred_region
        %s244 = ssub.s32 %s16, 1
        %p245 = scmp.lt.s32.totalorder %s21, 1
        %s246 = scalar_select %p245, %s21, 1
        %s247 = smul.addr %s246, 8
        %s248 = scalar_lea.vmem %s0, %s247
        %p249 = pneg %p42
        %p250 = pneg %p39
        %p251 = pneg %p63
        %p252 = pneg %p60
        %p253 = pneg %p84
        %p254 = pneg %p81
        %p255 = pneg %p105
        %p256 = pneg %p102
        %p257 = pneg %p126
        %p258 = pneg %p123
        %p259 = pneg %p147
        %p260 = pneg %p144
        %p261 = pneg %p168
        %p262 = pneg %p165
        %p263 = pneg %p194
        %p264 = pneg %p191
        %s265 = sand.u32 %s181, 1
        %s266 = scalar_lea.sflag [#allocation3], %s265
        %s267 = sand.u32 %s181, 1
        %s268 = smul.addr %s267, 8
        %s269 = scalar_lea.vmem [#allocation2], %s268
        %p270 = scmp.lt.s32.totalorder %s21, 1
        %s271 = scalar_select %p270, %s21, 1
        %s272 = smul.addr %s271, 8
        %s273 = scalar_lea.vmem %s0, %s272
        %v274 = vld [vmem:[%s273] sm:$0xff]
        %v275 = vld [vmem:[%s1] sm:$0xff]
        %v276 = vld [vmem:[%s1 + $0x8] sm:$0xff]
        %v277 = vld [vmem:[%s1 + $0x10] sm:$0xff]
        %v278 = vld [vmem:[%s1 + $0x18] sm:$0xff]
        %v279 = vld [vmem:[%s1 + $0x20] sm:$0xff]
        %v280 = vld [vmem:[%s1 + $0x28] sm:$0xff]
        %v281 = vld [vmem:[%s1 + $0x30] sm:$0xff]
        %v282 = vld [vmem:[%s1 + $0x38] sm:$0xff]
        %v283 = vld [vmem:[%s1 + $0x40] sm:$0xff]
        %v284 = vld [vmem:[%s1 + $0x48] sm:$0xff]
        %v285 = vld [vmem:[%s1 + $0x50] sm:$0xff]
        %v286 = vld [vmem:[%s1 + $0x58] sm:$0xff]
        %v287 = vld [vmem:[%s1 + $0x60] sm:$0xff]
        %v288 = vld [vmem:[%s1 + $0x68] sm:$0xff]
        %v289 = vld [vmem:[%s1 + $0x70] sm:$0xff]
        %v290 = vld [vmem:[%s1 + $0x78] sm:$0xff]
        %v291 = vld [vmem:[%s2] sm:$0x1]
        %v293 = vperm.slane %v291, 0
        %295 = vmatpush.msra.mxu0 %v290
        %296 = vmatpush.msra.mxu0 %v289
        %297 = vmatpush.msra.mxu0 %v288
        %298 = vmatpush.msra.mxu0 %v287
        %299 = vmatpush.msra.mxu0 %v286
        %300 = vmatpush.msra.mxu0 %v285
        %301 = vmatpush.msra.mxu0 %v284
        %302 = vmatpush.msra.mxu0 %v283
        %303 = vmatpush.msra.mxu0 %v282
        %304 = vmatpush.msra.mxu0 %v281
        %305 = vmatpush.msra.mxu0 %v280
        %306 = vmatpush.msra.mxu0 %v279
        %307 = vmatpush.msra.mxu0 %v278
        %308 = vmatpush.msra.mxu0 %v277
        %309 = vmatpush.msra.mxu0 %v276
        %310 = vmatpush.msra.mxu0 %v275
        %311 = vmatmul.f32.gmra.mxu0 %v274
        %v312 = vpop.f32.mrf.mxu0
        %v313 = vadd.f32 %v293, %v312
        %314 = vdwg.mxu0
        %v315 = vmax.f32 %v313, 0.0
        %v316 = vld [vmem:[%s3] sm:$0xff]
        %v317 = vld [vmem:[%s3 + $0x8] sm:$0xff]
        %v318 = vld [vmem:[%s3 + $0x10] sm:$0xff]
        %v319 = vld [vmem:[%s3 + $0x18] sm:$0xff]
        %v320 = vld [vmem:[%s3 + $0x20] sm:$0xff]
        %v321 = vld [vmem:[%s3 + $0x28] sm:$0xff]
        %v322 = vld [vmem:[%s3 + $0x30] sm:$0xff]
        %v323 = vld [vmem:[%s3 + $0x38] sm:$0xff]
        %v324 = vld [vmem:[%s4] sm:$0x1]
        %v326 = vperm.slane %v324, 0
        %vm328 = vcmask 523264
        %v330 = vsel %vm328, %v315, 0
        %332 = vmatpush.msra.mxu0 0.0
        %333 = vmatpush.msra.mxu0 0.0
        %334 = vmatpush.msra.mxu0 0.0
        %335 = vmatpush.msra.mxu0 0.0
        %336 = vmatpush.msra.mxu0 0.0
        %337 = vmatpush.msra.mxu0 0.0
        %338 = vmatpush.msra.mxu0 0.0
        %339 = vmatpush.msra.mxu0 0.0
        %340 = vmatpush.msra.mxu0 %v323
        %341 = vmatpush.msra.mxu0 %v322
        %342 = vmatpush.msra.mxu0 %v321
        %343 = vmatpush.msra.mxu0 %v320
        %344 = vmatpush.msra.mxu0 %v319
        %345 = vmatpush.msra.mxu0 %v318
        %346 = vmatpush.msra.mxu0 %v317
        %347 = vmatpush.msra.mxu0 %v316
        %348 = vmatmul.f32.gmra.mxu0 %v330
        %v349 = vpop.f32.mrf.mxu0
        %v350 = vadd.f32 %v326, %v349
        %351 = vdwg.mxu0
        %v352 = vadd.f32 %v350, %v274
        %v353 = vld [vmem:[%s5] sm:$0x1]
        %v354 = vld [vmem:[%s6] sm:$0x1]
        %355 = vadd.xlane.f32.xlu0 %v352
        %v356 = vpop.xlane.xlu0 %355
        %v357 = vmul.f32 %v356, 0.03125
        %v358 = vmul.f32 %v352, %v352
        %359 = vadd.xlane.f32.xlu0 %v358
        %v360 = vpop.xlane.xlu0 %359
        %v361 = vmul.f32 %v360, 0.03125
        %v362 = vmul.f32 %v357, %v357
        %v363 = vsub.f32 %v361, %v362
        %v364 = vmax.f32 %v363, 0.0
        %v365 = vsub.f32 %v352, %v357
        %v366 = vadd.f32 %v364, 1e-05
        %v367 = vrsqrt.pop %v366
        %v368 = vmul.f32 %v367, %v366
        %v369 = vmul.f32 %v368, %v367
        %v370 = vmul.f32 0.5, %v369
        %v371 = vsub.f32 1.5, %v370
        %v372 = vmul.f32 %v367, %v371
        %vm373 = vweird.f32 %v366
        %vm374 = vweird.f32 %v367
        %vm375 = vmor %vm373, %vm374
        %v376 = vsel %vm375, %v367, %v372
        %v377 = vmul.f32 %v365, %v376
        %v379 = vperm.slane %v353, 0
        %v381 = vmul.f32 %v377, %v379
        %v383 = vperm.slane %v354, 0
        %v385 = vadd.f32 %v381, %v383
        %386 = vst [vmem:[%s269] sm:$0xff] %v385
        %s387 = sand.u32 %s181, 1
        %s388 = scalar_lea.sflag [#allocation3], %s387
        %s389 = sand.u32 %s181, 1
        %s390 = smul.addr %s389, 8
        %s391 = scalar_lea.vmem [#allocation2], %s390
        // Predicated region
        $region49: #{tpu_custom_call.1} parent=47 // pred_check
          %p392 = pneg %p191
        $region50: #{tpu_custom_call.1} parent=47 // pred_check_branch
          %394 = sbr.rel (%p392) target = $region52
        $region51: #{tpu_custom_call.1} parent=47 // pred_region
          %396 = vsyncadd %s388, 0
          %s397 = smul.addr %s21, 8
          %s398 = scalar_lea.hbm %s7, %s397
          %s400 = sshll.u32 %s391, 4
          %s401 = int_to_ptr.vmem [resolvable:$true] %s400
          %s402 = sshll.u32 %s398, 4
          %s403 = int_to_ptr.hbm [resolvable:$true] %s402
          %405 = dma.vmem_to_hbm [thread:$0]  %s401, 128, %s403, %s388
        $region52: #{tpu_custom_call.1} parent=47 // pred_fallthru
          _
      $region48: #{tpu_custom_call.1} parent=5 // pred_fallthru
        _
      %p406 = scmp.le.s32.totalorder 2, %s16
      // Predicated region
      $region53: #{tpu_custom_call.1} parent=5 // pred_check
        %p407 = pneg %p406
      $region54: #{tpu_custom_call.1} parent=5 // pred_check_branch
        %409 = sbr.rel (%p407) target = $region56
      $region55: #{tpu_custom_call.1} parent=5 // pred_region
        %s410 = ssub.s32 %s16, 2
        // Predicated region
        $region57: #{tpu_custom_call.1} parent=55 // pred_check
          %p411 = pneg %p197
        $region58: #{tpu_custom_call.1} parent=55 // pred_check_branch
          %413 = sbr.rel (%p411) target = $region60
        $region59: #{tpu_custom_call.1} parent=55 // pred_region
          %s414 = sand.u32 %s182, 1
          %s415 = scalar_lea.sflag [#allocation3], %s414
          %s416 = sand.u32 %s182, 1
          %s417 = smul.addr %s416, 8
          %s418 = scalar_lea.vmem [#allocation2], %s417
          %420 = dma.done %s415, 128
        $region60: #{tpu_custom_call.1} parent=55 // pred_fallthru
          _
      $region56: #{tpu_custom_call.1} parent=5 // pred_fallthru
        _
    $region6: #{tpu_custom_call.1} parent=1 // loop_footer
      %s20 = sadd.s32 1, %s16
    $region7: #{tpu_custom_call.1} parent=1 // loop_footer_branch
      %15 = sbr.rel target = $region3
    $region8: #{tpu_custom_call.1} parent=1 // loop_exit
      _
    %421 = vsyncpa [#allocation3], 1
    %s422 = scalar_lea.sflag [#allocation3], 1
    %423 = vsyncpa %s422, 1

// kernel: tpu_custom_call.1
$region0: #{tpu_custom_call.1}
  #allocation0 [shape = 'u32[]', space=smem, size = 0x4, offset = 0x4, fixed_abs, tag = 'smem constant byte address 0x4 - core index']
  #allocation1 [shape = 'u32[72,128]{1,0:T(1,128)}', space=vmem, size = 0x9000, scoped, tag = 'internal scratch']
  %s0 = inlined_call_operand.vmem [shape: f32[16,128], index: 0, kind: input, shape index: {}]
  %s1 = inlined_call_operand.vmem [shape: f32[128,64], index: 1, kind: input, shape index: {}]
  %s2 = inlined_call_operand.vmem [shape: f32[1,64], index: 2, kind: input, shape index: {}]
  %s3 = inlined_call_operand.vmem [shape: f32[64,128], index: 3, kind: input, shape index: {}]
  %s4 = inlined_call_operand.vmem [shape: f32[1,128], index: 4, kind: input, shape index: {}]
  %s5 = inlined_call_operand.vmem [shape: f32[1,128], index: 5, kind: input, shape index: {}]
  %s6 = inlined_call_operand.vmem [shape: f32[1,128], index: 6, kind: input, shape index: {}]
  %s7 = inlined_call_operand.hbm [shape: f32[16,128], index: 7, kind: output, shape index: {}]
  %s8 = sld [smem:[#allocation0]]
  $region61: #{tpu_custom_call.1} parent=0
    _
  %s10 = ssub.s32 1, %s8
  %s11 = scalar_select 0, %s10, %s8
  $region1: #{tpu_custom_call.1} parent=0
    #allocation2 [shape = 'u8[8192]{0}', space=vmem, size = 0x2000, scoped, tag = 'output window, operand 0']
    #allocation3 [shape = 's32[2]{0}', space=sflag, size = 0x8, scoped, tag = 'scoped memory for tpu_custom_call.1']
    %12 = vsyncpa [#allocation3], 0
    %s13 = scalar_lea.sflag [#allocation3], 1
    %14 = vsyncpa %s13, 0
    loop: start=0, step=1, limit=4
    $region2: #{tpu_custom_call.1} parent=1 // loop_pre_header
      _
    $region3: #{tpu_custom_call.1} parent=1 // loop_header
      %s16 = sphi 0, %s20
      %p17 = scmp.ge.s32.totalorder %s16, 4
      %s26 = sphi 0, %s28
      %s29 = sphi 0, %s26
      %s30 = sphi 0, %s29
      %s46 = sphi 0, %s30
      %s50 = sphi 0, %s50
      %s52 = sphi 0, %s50
      %s53 = sphi 0, %s52
      %s67 = sphi 0, %s53
      %s71 = sphi 0, %s71
      %s73 = sphi 0, %s71
      %s74 = sphi 0, %s73
      %s88 = sphi 0, %s74
      %s92 = sphi 0, %s92
      %s94 = sphi 0, %s92
      %s95 = sphi 0, %s94
      %s109 = sphi 0, %s95
      %s113 = sphi 0, %s113
      %s115 = sphi 0, %s113
      %s116 = sphi 0, %s115
      %s130 = sphi 0, %s116
      %s134 = sphi 0, %s134
      %s136 = sphi 0, %s134
      %s137 = sphi 0, %s136
      %s151 = sphi 0, %s137
      %s155 = sphi 0, %s155
      %s157 = sphi 0, %s155
      %s158 = sphi 0, %s157
      %s172 = sphi 0, %s158
      %s178 = sphi 0, %s180
      %s181 = sphi 0, %s178
      %s182 = sphi 0, %s181
      %s198 = sphi 0, %s182
    $region4: #{tpu_custom_call.1} parent=1 // loop_header_branch
      %19 = sbr.rel (%p17) target = $region8
    $region5: #{tpu_custom_call.1} parent=1 // loop_body
      %s21 = ssub.s32 %s16, 1
      %s22 = ssub.s32 %s16, 2
      %s23 = sadd.s32 %s16, 1
      %s24 = ssub.s32 %s16, %s23
      %p25 = scmp.eq.s32.totalorder %s24, 0
      %s27 = sadd.s32 %s26, 1
      %s28 = scalar_select %p25, %s26, %s27
      %p31 = pneg %p25
      %p32 = scmp.eq.s32.totalorder %s16, 1
      %p33 = por %p31, %p32
      %p34 = scmp.ne.s32.totalorder %s26, %s29
      %p35 = scmp.eq.s32.totalorder %s16, 0
      %p36 = por %p34, %p35
      %p37 = scmp.ne.s32.totalorder %s26, %s29
      %p38 = scmp.eq.s32.totalorder %s21, 1
      %p39 = por %p37, %p38
      %p40 = scmp.ne.s32.totalorder %s29, %s30
      %p41 = scmp.eq.s32.totalorder %s21, 0
      %p42 = por %p40, %p41
      %p43 = scmp.ne.s32.totalorder %s29, %s30
      %p44 = scmp.eq.s32.totalorder %s22, 1
      %p45 = por %p43, %p44
      %p47 = scmp.ne.s32.totalorder %s30, %s46
      %p48 = scmp.eq.s32.totalorder %s22, 0
      %p49 = por %p47, %p48
      %s51 = sadd.s32 %s50, 1
      %p54 = scmp.eq.s32.totalorder %s16, 1
      %p55 = scmp.ne.s32.totalorder %s50, %s52
      %p56 = scmp.eq.s32.totalorder %s16, 0
      %p57 = por %p55, %p56
      %p58 = scmp.ne.s32.totalorder %s50, %s52
      %p59 = scmp.eq.s32.totalorder %s21, 1
      %p60 = por %p58, %p59
      %p61 = scmp.ne.s32.totalorder %s52, %s53
      %p62 = scmp.eq.s32.totalorder %s21, 0
      %p63 = por %p61, %p62
      %p64 = scmp.ne.s32.totalorder %s52, %s53
      %p65 = scmp.eq.s32.totalorder %s22, 1
      %p66 = por %p64, %p65
      %p68 = scmp.ne.s32.totalorder %s53, %s67
      %p69 = scmp.eq.s32.totalorder %s22, 0
      %p70 = por %p68, %p69
      %s72 = sadd.s32 %s71, 1
      %p75 = scmp.eq.s32.totalorder %s16, 1
      %p76 = scmp.ne.s32.totalorder %s71, %s73
      %p77 = scmp.eq.s32.totalorder %s16, 0
      %p78 = por %p76, %p77
      %p79 = scmp.ne.s32.totalorder %s71, %s73
      %p80 = scmp.eq.s32.totalorder %s21, 1
      %p81 = por %p79, %p80
      %p82 = scmp.ne.s32.totalorder %s73, %s74
      %p83 = scmp.eq.s32.totalorder %s21, 0
      %p84 = por %p82, %p83
      %p85 = scmp.ne.s32.totalorder %s73, %s74
      %p86 = scmp.eq.s32.totalorder %s22, 1
      %p87 = por %p85, %p86
      %p89 = scmp.ne.s32.totalorder %s74, %s88
      %p90 = scmp.eq.s32.totalorder %s22, 0
      %p91 = por %p89, %p90
      %s93 = sadd.s32 %s92, 1
      %p96 = scmp.eq.s32.totalorder %s16, 1
      %p97 = scmp.ne.s32.totalorder %s92, %s94
      %p98 = scmp.eq.s32.totalorder %s16, 0
      %p99 = por %p97, %p98
      %p100 = scmp.ne.s32.totalorder %s92, %s94
      %p101 = scmp.eq.s32.totalorder %s21, 1
      %p102 = por %p100, %p101
      %p103 = scmp.ne.s32.totalorder %s94, %s95
      %p104 = scmp.eq.s32.totalorder %s21, 0
      %p105 = por %p103, %p104
      %p106 = scmp.ne.s32.totalorder %s94, %s95
      %p107 = scmp.eq.s32.totalorder %s22, 1
      %p108 = por %p106, %p107
      %p110 = scmp.ne.s32.totalorder %s95, %s109
      %p111 = scmp.eq.s32.totalorder %s22, 0
      %p112 = por %p110, %p111
      %s114 = sadd.s32 %s113, 1
      %p117 = scmp.eq.s32.totalorder %s16, 1
      %p118 = scmp.ne.s32.totalorder %s113, %s115
      %p119 = scmp.eq.s32.totalorder %s16, 0
      %p120 = por %p118, %p119
      %p121 = scmp.ne.s32.totalorder %s113, %s115
      %p122 = scmp.eq.s32.totalorder %s21, 1
      %p123 = por %p121, %p122
      %p124 = scmp.ne.s32.totalorder %s115, %s116
      %p125 = scmp.eq.s32.totalorder %s21, 0
      %p126 = por %p124, %p125
      %p127 = scmp.ne.s32.totalorder %s115, %s116
      %p128 = scmp.eq.s32.totalorder %s22, 1
      %p129 = por %p127, %p128
      %p131 = scmp.ne.s32.totalorder %s116, %s130
      %p132 = scmp.eq.s32.totalorder %s22, 0
      %p133 = por %p131, %p132
      %s135 = sadd.s32 %s134, 1
      %p138 = scmp.eq.s32.totalorder %s16, 1
      %p139 = scmp.ne.s32.totalorder %s134, %s136
      %p140 = scmp.eq.s32.totalorder %s16, 0
      %p141 = por %p139, %p140
      %p142 = scmp.ne.s32.totalorder %s134, %s136
      %p143 = scmp.eq.s32.totalorder %s21, 1
      %p144 = por %p142, %p143
      %p145 = scmp.ne.s32.totalorder %s136, %s137
      %p146 = scmp.eq.s32.totalorder %s21, 0
      %p147 = por %p145, %p146
      %p148 = scmp.ne.s32.totalorder %s136, %s137
      %p149 = scmp.eq.s32.totalorder %s22, 1
      %p150 = por %p148, %p149
      %p152 = scmp.ne.s32.totalorder %s137, %s151
      %p153 = scmp.eq.s32.totalorder %s22, 0
      %p154 = por %p152, %p153
      %s156 = sadd.s32 %s155, 1
      %p159 = scmp.eq.s32.totalorder %s16, 1
      %p160 = scmp.ne.s32.totalorder %s155, %s157
      %p161 = scmp.eq.s32.totalorder %s16, 0
      %p162 = por %p160, %p161
      %p163 = scmp.ne.s32.totalorder %s155, %s157
      %p164 = scmp.eq.s32.totalorder %s21, 1
      %p165 = por %p163, %p164
      %p166 = scmp.ne.s32.totalorder %s157, %s158
      %p167 = scmp.eq.s32.totalorder %s21, 0
      %p168 = por %p166, %p167
      %p169 = scmp.ne.s32.totalorder %s157, %s158
      %p170 = scmp.eq.s32.totalorder %s22, 1
      %p171 = por %p169, %p170
      %p173 = scmp.ne.s32.totalorder %s158, %s172
      %p174 = scmp.eq.s32.totalorder %s22, 0
      %p175 = por %p173, %p174
      %s176 = ssub.s32 %s16, %s23
      %p177 = scmp.eq.s32.totalorder %s176, 0
      %s179 = sadd.s32 %s178, 1
      %s180 = scalar_select %p177, %s178, %s179
      %p183 = pneg %p177
      %p184 = scmp.eq.s32.totalorder %s16, 1
      %p185 = por %p183, %p184
      %p186 = scmp.ne.s32.totalorder %s178, %s181
      %p187 = scmp.eq.s32.totalorder %s16, 0
      %p188 = por %p186, %p187
      %p189 = scmp.ne.s32.totalorder %s178, %s181
      %p190 = scmp.eq.s32.totalorder %s21, 1
      %p191 = por %p189, %p190
      %p192 = scmp.ne.s32.totalorder %s181, %s182
      %p193 = scmp.eq.s32.totalorder %s21, 0
      %p194 = por %p192, %p193
      %p195 = scmp.ne.s32.totalorder %s181, %s182
      %p196 = scmp.eq.s32.totalorder %s22, 1
      %p197 = por %p195, %p196
      %p199 = scmp.ne.s32.totalorder %s182, %s198
      %p200 = scmp.eq.s32.totalorder %s22, 0
      %p201 = por %p199, %p200
      %p202 = scmp.le.s32.totalorder 1, %s16
      %p203 = scmp.lt.s32.totalorder %s16, 3
      %p204 = pnand %p202, %p203
      %p205 = pneg %p204
      // Predicated region
      $region9: #{tpu_custom_call.1} parent=5 // pred_check
        _
      $region10: #{tpu_custom_call.1} parent=5 // pred_check_branch
        %207 = sbr.rel (%p204) target = $region12
      $region11: #{tpu_custom_call.1} parent=5 // pred_region
        %s208 = ssub.s32 %s16, 1
        // Predicated region
        $region13: #{tpu_custom_call.1} parent=11 // pred_check
          %p209 = pneg %p63
        $region14: #{tpu_custom_call.1} parent=11 // pred_check_branch
          %211 = sbr.rel (%p209) target = $region16
        $region15: #{tpu_custom_call.1} parent=11 // pred_region
          _
        $region16: #{tpu_custom_call.1} parent=11 // pred_fallthru
          _
        // Predicated region
        $region17: #{tpu_custom_call.1} parent=11 // pred_check
          %p212 = pneg %p84
        $region18: #{tpu_custom_call.1} parent=11 // pred_check_branch
          %214 = sbr.rel (%p212) target = $region20
        $region19: #{tpu_custom_call.1} parent=11 // pred_region
          _
        $region20: #{tpu_custom_call.1} parent=11 // pred_fallthru
          _
        // Predicated region
        $region21: #{tpu_custom_call.1} parent=11 // pred_check
          %p215 = pneg %p105
        $region22: #{tpu_custom_call.1} parent=11 // pred_check_branch
          %217 = sbr.rel (%p215) target = $region24
        $region23: #{tpu_custom_call.1} parent=11 // pred_region
          _
        $region24: #{tpu_custom_call.1} parent=11 // pred_fallthru
          _
        // Predicated region
        $region25: #{tpu_custom_call.1} parent=11 // pred_check
          %p218 = pneg %p126
        $region26: #{tpu_custom_call.1} parent=11 // pred_check_branch
          %220 = sbr.rel (%p218) target = $region28
        $region27: #{tpu_custom_call.1} parent=11 // pred_region
          _
        $region28: #{tpu_custom_call.1} parent=11 // pred_fallthru
          _
        // Predicated region
        $region29: #{tpu_custom_call.1} parent=11 // pred_check
          %p221 = pneg %p147
        $region30: #{tpu_custom_call.1} parent=11 // pred_check_branch
          %223 = sbr.rel (%p221) target = $region32
        $region31: #{tpu_custom_call.1} parent=11 // pred_region
          _
        $region32: #{tpu_custom_call.1} parent=11 // pred_fallthru
          _
        // Predicated region
        $region33: #{tpu_custom_call.1} parent=11 // pred_check
          %p224 = pneg %p168
        $region34: #{tpu_custom_call.1} parent=11 // pred_check_branch
          %226 = sbr.rel (%p224) target = $region36
        $region35: #{tpu_custom_call.1} parent=11 // pred_region
          _
        $region36: #{tpu_custom_call.1} parent=11 // pred_fallthru
          _
      $region12: #{tpu_custom_call.1} parent=5 // pred_fallthru
        _
      %p227 = scmp.lt.s32.totalorder %s16, 2
      // Predicated region
      $region37: #{tpu_custom_call.1} parent=5 // pred_check
        %p228 = pneg %p227
      $region38: #{tpu_custom_call.1} parent=5 // pred_check_branch
        %230 = sbr.rel (%p228) target = $region40
      $region39: #{tpu_custom_call.1} parent=5 // pred_region
        // Predicated region
        $region41: #{tpu_custom_call.1} parent=39 // pred_check
          %p231 = pneg %p36
        $region42: #{tpu_custom_call.1} parent=39 // pred_check_branch
          %233 = sbr.rel (%p231) target = $region44
        $region43: #{tpu_custom_call.1} parent=39 // pred_region
          %p234 = scmp.lt.s32.totalorder %s16, 1
          %s235 = scalar_select %p234, %s16, 1
          %s236 = smul.addr %s235, 8
          %s237 = scalar_lea.vmem %s0, %s236
        $region44: #{tpu_custom_call.1} parent=39 // pred_fallthru
          _
      $region40: #{tpu_custom_call.1} parent=5 // pred_fallthru
        _
      %p238 = scmp.le.s32.totalorder 1, %s16
      %p239 = scmp.lt.s32.totalorder %s16, 3
      %p240 = pnand %p238, %p239
      %p241 = pneg %p240
      // Predicated region
      $region45: #{tpu_custom_call.1} parent=5 // pred_check
        _
      $region46: #{tpu_custom_call.1} parent=5 // pred_check_branch
        %243 = sbr.rel (%p240) target = $region48
      $region47: #{tpu_custom_call.1} parent=5 // pred_region
        %s244 = ssub.s32 %s16, 1
        %p245 = scmp.lt.s32.totalorder %s21, 1
        %s246 = scalar_select %p245, %s21, 1
        %s247 = smul.addr %s246, 8
        %s248 = scalar_lea.vmem %s0, %s247
        %p249 = pneg %p42
        %p250 = pneg %p39
        %p251 = pneg %p63
        %p252 = pneg %p60
        %p253 = pneg %p84
        %p254 = pneg %p81
        %p255 = pneg %p105
        %p256 = pneg %p102
        %p257 = pneg %p126
        %p258 = pneg %p123
        %p259 = pneg %p147
        %p260 = pneg %p144
        %p261 = pneg %p168
        %p262 = pneg %p165
        %p263 = pneg %p194
        %p264 = pneg %p191
        %s265 = sand.u32 %s181, 1
        %s266 = scalar_lea.sflag [#allocation3], %s265
        %s267 = sand.u32 %s181, 1
        %s268 = smul.addr %s267, 8
        %s269 = scalar_lea.vmem [#allocation2], %s268
        %p270 = scmp.lt.s32.totalorder %s21, 1
        %s271 = scalar_select %p270, %s21, 1
        %s272 = smul.addr %s271, 8
        %s273 = scalar_lea.vmem %s0, %s272
        %v274 = vld [vmem:[%s273] sm:$0xff]
        %v275 = vld [vmem:[%s1] sm:$0xff]
        %v276 = vld [vmem:[%s1 + $0x8] sm:$0xff]
        %v277 = vld [vmem:[%s1 + $0x10] sm:$0xff]
        %v278 = vld [vmem:[%s1 + $0x18] sm:$0xff]
        %v279 = vld [vmem:[%s1 + $0x20] sm:$0xff]
        %v280 = vld [vmem:[%s1 + $0x28] sm:$0xff]
        %v281 = vld [vmem:[%s1 + $0x30] sm:$0xff]
        %v282 = vld [vmem:[%s1 + $0x38] sm:$0xff]
        %v283 = vld [vmem:[%s1 + $0x40] sm:$0xff]
        %v284 = vld [vmem:[%s1 + $0x48] sm:$0xff]
        %v285 = vld [vmem:[%s1 + $0x50] sm:$0xff]
        %v286 = vld [vmem:[%s1 + $0x58] sm:$0xff]
        %v287 = vld [vmem:[%s1 + $0x60] sm:$0xff]
        %v288 = vld [vmem:[%s1 + $0x68] sm:$0xff]
        %v289 = vld [vmem:[%s1 + $0x70] sm:$0xff]
        %v290 = vld [vmem:[%s1 + $0x78] sm:$0xff]
        %v291 = vld [vmem:[%s2] sm:$0x1]
        %v293 = vperm.slane %v291, 0
        %295 = vmatpush.msra.mxu0 %v290
        %296 = vmatpush.msra.mxu0 %v289
        %297 = vmatpush.msra.mxu0 %v288
        %298 = vmatpush.msra.mxu0 %v287
        %299 = vmatpush.msra.mxu0 %v286
        %300 = vmatpush.msra.mxu0 %v285
        %301 = vmatpush.msra.mxu0 %v284
        %302 = vmatpush.msra.mxu0 %v283
        %303 = vmatpush.msra.mxu0 %v282
        %304 = vmatpush.msra.mxu0 %v281
        %305 = vmatpush.msra.mxu0 %v280
        %306 = vmatpush.msra.mxu0 %v279
        %307 = vmatpush.msra.mxu0 %v278
        %308 = vmatpush.msra.mxu0 %v277
        %309 = vmatpush.msra.mxu0 %v276
        %310 = vmatpush.msra.mxu0 %v275
        %311 = vmatmul.f32.gmra.mxu0 %v274
        %v312 = vpop.f32.mrf.mxu0
        %v313 = vadd.f32 %v293, %v312
        %314 = vdwg.mxu0
        %v315 = vmax.f32 %v313, 0.0
        %v316 = vld [vmem:[%s3] sm:$0xff]
        %v317 = vld [vmem:[%s3 + $0x8] sm:$0xff]
        %v318 = vld [vmem:[%s3 + $0x10] sm:$0xff]
        %v319 = vld [vmem:[%s3 + $0x18] sm:$0xff]
        %v320 = vld [vmem:[%s3 + $0x20] sm:$0xff]
        %v321 = vld [vmem:[%s3 + $0x28] sm:$0xff]
        %v322 = vld [vmem:[%s3 + $0x30] sm:$0xff]
        %v323 = vld [vmem:[%s3 + $0x38] sm:$0xff]
        %v324 = vld [vmem:[%s4] sm:$0x1]
        %v326 = vperm.slane %v324, 0
        %vm328 = vcmask 523264
        %v330 = vsel %vm328, %v315, 0
        %332 = vmatpush.msra.mxu0 0.0
        %333 = vmatpush.msra.mxu0 0.0
        %334 = vmatpush.msra.mxu0 0.0
        %335 = vmatpush.msra.mxu0 0.0
        %336 = vmatpush.msra.mxu0 0.0
        %337 = vmatpush.msra.mxu0 0.0
        %338 = vmatpush.msra.mxu0 0.0
        %339 = vmatpush.msra.mxu0 0.0
        %340 = vmatpush.msra.mxu0 %v323
        %341 = vmatpush.msra.mxu0 %v322
        %342 = vmatpush.msra.mxu0 %v321
        %343 = vmatpush.msra.mxu0 %v320
        %344 = vmatpush.msra.mxu0 %v319
        %345 = vmatpush.msra.mxu0 %v318
        %346 = vmatpush.msra.mxu0 %v317
        %347 = vmatpush.msra.mxu0 %v316
        %348 = vmatmul.f32.gmra.mxu0 %v330
        %v349 = vpop.f32.mrf.mxu0
        %v350 = vadd.f32 %v326, %v349
        %351 = vdwg.mxu0
        %v352 = vadd.f32 %v350, %v274
        %v353 = vld [vmem:[%s5] sm:$0x1]
        %v354 = vld [vmem:[%s6] sm:$0x1]
        %355 = vadd.xlane.f32.xlu0 %v352
        %v356 = vpop.xlane.xlu0 %355
        %v357 = vmul.f32 %v356, 0.03125
        %v358 = vmul.f32 %v352, %v352
        %359 = vadd.xlane.f32.xlu0 %v358
        %v360 = vpop.xlane.xlu0 %359
        %v361 = vmul.f32 %v360, 0.03125
        %v362 = vmul.f32 %v357, %v357
        %v363 = vsub.f32 %v361, %v362
        %v364 = vmax.f32 %v363, 0.0
        %v365 = vsub.f32 %v352, %v357
        %v366 = vadd.f32 %v364, 1e-05
        %v367 = vrsqrt.pop %v366
        %v368 = vmul.f32 %v367, %v366
        %v369 = vmul.f32 %v368, %v367
        %v370 = vmul.f32 0.5, %v369
        %v371 = vsub.f32 1.5, %v370
        %v372 = vmul.f32 %v367, %v371
        %vm373 = vweird.f32 %v366
        %vm374 = vweird.f32 %v367
        %vm375 = vmor %vm373, %vm374
        %v376 = vsel %vm375, %v367, %v372
        %v377 = vmul.f32 %v365, %v376
        %v379 = vperm.slane %v353, 0
        %v381 = vmul.f32 %v377, %v379
        %v383 = vperm.slane %v354, 0
        %v385 = vadd.f32 %v381, %v383
        %386 = vst [vmem:[%s269] sm:$0xff] %v385
        %s387 = sand.u32 %s181, 1
        %s388 = scalar_lea.sflag [#allocation3], %s387
        %s389 = sand.u32 %s181, 1
        %s390 = smul.addr %s389, 8
        %s391 = scalar_lea.vmem [#allocation2], %s390
        // Predicated region
        $region49: #{tpu_custom_call.1} parent=47 // pred_check
          %p392 = pneg %p191
        $region50: #{tpu_custom_call.1} parent=47 // pred_check_branch
          %394 = sbr.rel (%p392) target = $region52
        $region51: #{tpu_custom_call.1} parent=47 // pred_region
          %396 = vsyncadd %s388, 0
          %s397 = smul.addr %s21, 8
          %s398 = scalar_lea.hbm %s7, %s397
          %s400 = sshll.u32 %s391, 4
          %s401 = int_to_ptr.vmem [resolvable:$true] %s400
          %s402 = sshll.u32 %s398, 4
          %s403 = int_to_ptr.hbm [resolvable:$true] %s402
          %405 = dma.vmem_to_hbm [thread:$0]  %s401, 128, %s403, %s388
        $region52: #{tpu_custom_call.1} parent=47 // pred_fallthru
          _
      $region48: #{tpu_custom_call.1} parent=5 // pred_fallthru
        _
      %p406 = scmp.le.s32.totalorder 2, %s16
      // Predicated region
      $region53: #{tpu_custom_call.1} parent=5 // pred_check
        %p407 = pneg %p406
      $region54: #{tpu_custom_call.1} parent=5 // pred_check_branch
        %409 = sbr.rel (%p407) target = $region56
      $region55: #{tpu_custom_call.1} parent=5 // pred_region
        %s410 = ssub.s32 %s16, 2
        // Predicated region
        $region57: #{tpu_custom_call.1} parent=55 // pred_check
          %p411 = pneg %p197
        $region58: #{tpu_custom_call.1} parent=55 // pred_check_branch
          %413 = sbr.rel (%p411) target = $region60
        $region59: #{tpu_custom_call.1} parent=55 // pred_region
          %s414 = sand.u32 %s182, 1
          %s415 = scalar_lea.sflag [#allocation3], %s414
          %s416 = sand.u32 %s182, 1
          %s417 = smul.addr %s416, 8
          %s418 = scalar_lea.vmem [#allocation2], %s417
          %420 = dma.done %s415, 128
        $region60: #{tpu_custom_call.1} parent=55 // pred_fallthru
          _
      $region56: #{tpu_custom_call.1} parent=5 // pred_fallthru
        _
    $region6: #{tpu_custom_call.1} parent=1 // loop_footer
      %s20 = sadd.s32 1, %s16
    $region7: #{tpu_custom_call.1} parent=1 // loop_footer_branch
      %15 = sbr.rel target = $region3
    $region8: #{tpu_custom_call.1} parent=1 // loop_exit
      _
    %421 = vsyncpa [#allocation3], 1
    %s422 = scalar_lea.sflag [#allocation3], 1
    %423 = vsyncpa %s422, 1

</llo_original>
